<compile_context>
chip_gen: v6e
topology: v6e:2x2x1
jax: 0.10.0
libtpu: 0.0.40
codegen_flags: <defaults>
</compile_context>

<pallas_src>
import jax
import jax.numpy as jnp
from jax.experimental import pallas as pl
from jax.experimental.pallas import tpu as pltpu

BN_EPS = 1e-5   # PyTorch BatchNorm1d default eps
_LANE = 128


def _round_up(x, m):
    return ((x + m - 1) // m) * m


# ------------------------- fused Pallas kernel --------------------------------

def _make_fused_mlp_kernel(num_hidden, use_bf16):
    """Kernel for: num_hidden x (Linear -> BN(train) -> ReLU) -> Linear.

    Ref order: x, [w_i, gamma_beta_i(2,D)] * num_hidden, w_last, b_last, o_ref.
    Hidden-layer biases are intentionally not passed (cancel under train-mode BN).
    """

    def kernel(*refs):
        x_ref = refs[0]
        o_ref = refs[-1]

        h = x_ref[...]                       # (N, D) activations live in vregs/VMEM
        idx = 1
        for _ in range(num_hidden):
            w_ref, gb_ref = refs[idx], refs[idx + 1]
            idx += 2
            lhs = h.astype(jnp.bfloat16) if use_bf16 else h
            # Linear (no bias — cancels under BN mean subtraction). MXU, f32 accum.
            y = jnp.dot(lhs, w_ref[...], preferred_element_type=jnp.float32)
            # BatchNorm1d (training mode): batch mean / biased variance folded
            # into one scale/shift, reusing the centered tensor d. All f32.
            mean = jnp.mean(y, axis=0, keepdims=True)
            d = y - mean
            var = jnp.mean(d * d, axis=0, keepdims=True)
            gb = gb_ref[...]                 # (2, D): row 0 = gamma, row 1 = beta
            scale = gb[0:1, :] * jax.lax.rsqrt(var + BN_EPS)
            # ReLU
            h = jnp.maximum(d * scale + gb[1:2, :], 0.0)

        # Final layer: plain Linear (BN + activation stripped by layers[:-2]).
        w_ref, b_ref = refs[idx], refs[idx + 1]
        lhs = h.astype(jnp.bfloat16) if use_bf16 else h
        o_ref[...] = (
            jnp.dot(lhs, w_ref[...], preferred_element_type=jnp.float32)
            + b_ref[...]
        )

    return kernel


def mlp_kfe_forward(params, x):
    """Single fused pallas_call over the entire MLP."""
    num_hidden = len(params) - 1
    n, din = x.shape
    last = params[-1]
    dout = last["w"].shape[1]
    dout_pad = _round_up(dout, _LANE)        # lane-dense (unmasked) output store

    # bf16 MXU operands only once every contraction dim and N reach 128;
    # BN/ReLU stays f32 regardless (v5e has no bf16 VPU/EUP).
    contract_dims = [din] + [p["w"].shape[1] for p in params[:-1]]
    use_bf16 = (n >= 128) and all(d >= 128 for d in contract_dims)
    mxu_dtype = jnp.bfloat16 if use_bf16 else jnp.float32

    inputs = [x.astype(mxu_dtype)]
    for layer in params[:num_hidden]:
        inputs.append(layer["w"].astype(mxu_dtype))
        inputs.append(
            jnp.stack([layer["gamma"], layer["beta"]], axis=0).astype(jnp.float32)
        )
    w_last = last["w"].astype(mxu_dtype)
    b_last = last["b"].astype(jnp.float32)
    if dout_pad != dout:
        w_last = jnp.pad(w_last, ((0, 0), (0, dout_pad - dout)))
        b_last = jnp.pad(b_last, (0, dout_pad - dout))
    inputs.append(w_last)
    inputs.append(b_last.reshape(1, -1))

    # True (tiny) cost so XLA schedules neighbors around a near-zero-cost call.
    dims = [din] + [p["w"].shape[1] for p in params[:-1]] + [dout_pad]
    flops = sum(2 * n * a * b for a, b in zip(dims[:-1], dims[1:]))
    flops += sum(8 * n * d for d in dims[1:-1])          # BN + ReLU elementwise
    transcendentals = sum(dims[1:-1])                    # one rsqrt per feature
    out_bytes = n * dout_pad * 4
    in_bytes = sum(int(a.size * a.dtype.itemsize) for a in inputs)
    cost = pl.CostEstimate(
        flops=flops, transcendentals=transcendentals,
        bytes_accessed=in_bytes + out_bytes,
    )

    # Whole-network-resident VMEM budget (checked against the smallest chip:
    # v7x = 64 MiB physical). Beyond this, implement the tiling TODO above.
    act_bytes = sum(n * d * 4 for d in dims[1:])
    resident = in_bytes + out_bytes + act_bytes
    assert resident < (48 << 20), (
        f"MLP no longer fits resident in VMEM ({resident} B); tile over N."
    )
    vmem_limit = int(min(max(2 * resident, 8 << 20), 48 << 20))

    vmem = pl.BlockSpec(memory_space=pltpu.MemorySpace.VMEM)
    out_pad = pl.pallas_call(
        _make_fused_mlp_kernel(num_hidden, use_bf16),
        out_shape=jax.ShapeDtypeStruct((n, dout_pad), jnp.float32),
        in_specs=[vmem] * len(inputs),
        out_specs=vmem,
        cost_estimate=cost,
        compiler_params=pltpu.CompilerParams(vmem_limit_bytes=vmem_limit),
    )(*inputs)

    return out_pad[:, :dout] if dout_pad != dout else out_pad


# ------------------------- params & reference ----------------------------------

def init_mlp_kfe_params(key, input_dim, output_dim, hidden_dims):
    """Deterministic init mimicking PyTorch defaults:
    Linear: U(-1/sqrt(fan_in), 1/sqrt(fan_in)); BN: gamma=1, beta=0."""
    dims = [input_dim] + list(hidden_dims) + [output_dim]
    params = []
    for din, dout in zip(dims[:-1], dims[1:]):
        key, kw, kb = jax.random.split(key, 3)
        bound = 1.0 / jnp.sqrt(float(din))
        w = jax.random.uniform(kw, (din, dout), jnp.float32, -bound, bound)
        b = jax.random.uniform(kb, (dout,), jnp.float32, -bound, bound)
        gamma = jnp.ones((dout,), jnp.float32)
        beta = jnp.zeros((dout,), jnp.float32)
        params.append({"w": w, "b": b, "gamma": gamma, "beta": beta})
    return params


def mlp_kfe_reference(params, x):
    """Pure-JAX reference matching the PyTorch module (biases included)."""
    h = x
    for layer in params[:-1]:
        y = h @ layer["w"] + layer["b"]
        mean = jnp.mean(y, axis=0, keepdims=True)
        var = jnp.mean(jnp.square(y - mean), axis=0, keepdims=True)
        y = (y - mean) * jax.lax.rsqrt(var + BN_EPS)
        y = y * layer["gamma"] + layer["beta"]
        h = jnp.maximum(y, 0.0)
    last = params[-1]
    return h @ last["w"] + last["b"]


# ------------------------- main -------------------------------------------------

if __name__ == "__main__":
    batch = 128            # amortize dispatch / DMA latency (kernel is N-generic)
    input_dim = 32
    hidden_dims = [64, 64]
    output_dim = 16

    key = jax.random.PRNGKey(0)
    key, kx = jax.random.split(key)
    x = jax.random.normal(kx, (batch, input_dim), jnp.float32)

    params = init_mlp_kfe_params(key, input_dim, output_dim, hidden_dims)

    out = jax.block_until_ready(mlp_kfe_forward(params, x))

    ref = mlp_kfe_reference(params, x)
    assert out.shape == (batch, output_dim), out.shape
    assert jnp.allclose(out, ref, atol=1e-4, rtol=1e-4), (
        float(jnp.max(jnp.abs(out - ref)))
    )

    print("KERNEL_OK")
</pallas_src>

<mosaic_0001>
module attributes {stable_mosaic.version = 11 : i64} {
  func.func @kernel(%arg0: memref<128x32xf32, #tpu.memory_space<vmem>>, %arg1: memref<32x64xf32, #tpu.memory_space<vmem>>, %arg2: memref<2x64xf32, #tpu.memory_space<vmem>>, %arg3: memref<64x64xf32, #tpu.memory_space<vmem>>, %arg4: memref<2x64xf32, #tpu.memory_space<vmem>>, %arg5: memref<64x128xf32, #tpu.memory_space<vmem>>, %arg6: memref<1x128xf32, #tpu.memory_space<vmem>>, %arg7: memref<128x128xf32, #tpu.memory_space<vmem>>) attributes {dimension_semantics = [], scalar_prefetch = 0 : i64, scratch_operands = 0 : i64, tpu.core_type = #tpu.core_type<tc>} {
    %c0 = arith.constant 0 : index
    %c0_0 = arith.constant 0 : index
    %0 = vector.load %arg0[%c0, %c0_0] : memref<128x32xf32, #tpu.memory_space<vmem>>, vector<128x32xf32>
    %c0_1 = arith.constant 0 : index
    %c0_2 = arith.constant 0 : index
    %1 = vector.load %arg1[%c0_1, %c0_2] : memref<32x64xf32, #tpu.memory_space<vmem>>, vector<32x64xf32>
    %cst = arith.constant dense<0.000000e+00> : vector<128x64xf32>
    %2 = tpu.matmul %0, %1, %cst {dimension_numbers = #tpu.dot_dimension_numbers<[1], [0], [0], [1], [0, 0, 1, 1], [], []>} : vector<128x32xf32>, vector<32x64xf32>, vector<128x64xf32> -> vector<128x64xf32>
    %cst_3 = arith.constant dense<0.000000e+00> : vector<64xf32>
    %3 = vector.multi_reduction <add>, %2, %cst_3 [0] : vector<128x64xf32> to vector<64xf32>
    %4 = vector.shape_cast %3 : vector<64xf32> to vector<1x64xf32>
    %cst_4 = arith.constant 1.280000e+02 : f32
    %5 = vector.broadcast %cst_4 : f32 to vector<1x64xf32>
    %6 = arith.divf %4, %5 : vector<1x64xf32>
    %7 = vector.broadcast %6 : vector<1x64xf32> to vector<128x64xf32>
    %8 = arith.subf %2, %7 : vector<128x64xf32>
    %9 = arith.mulf %8, %8 : vector<128x64xf32>
    %cst_5 = arith.constant dense<0.000000e+00> : vector<64xf32>
    %10 = vector.multi_reduction <add>, %9, %cst_5 [0] : vector<128x64xf32> to vector<64xf32>
    %11 = vector.shape_cast %10 : vector<64xf32> to vector<1x64xf32>
    %cst_6 = arith.constant 1.280000e+02 : f32
    %12 = vector.broadcast %cst_6 : f32 to vector<1x64xf32>
    %13 = arith.divf %11, %12 : vector<1x64xf32>
    %c0_7 = arith.constant 0 : index
    %c0_8 = arith.constant 0 : index
    %14 = vector.load %arg2[%c0_7, %c0_8] : memref<2x64xf32, #tpu.memory_space<vmem>>, vector<2x64xf32>
    %15 = vector.extract_strided_slice %14 {offsets = [0, 0], sizes = [1, 64], strides = [1, 1]} : vector<2x64xf32> to vector<1x64xf32>
    %cst_9 = arith.constant 9.99999974E-6 : f32
    %16 = vector.broadcast %cst_9 : f32 to vector<1x64xf32>
    %17 = arith.addf %13, %16 : vector<1x64xf32>
    %18 = math.rsqrt %17 : vector<1x64xf32>
    %19 = arith.mulf %15, %18 : vector<1x64xf32>
    %20 = vector.broadcast %19 : vector<1x64xf32> to vector<128x64xf32>
    %21 = arith.mulf %8, %20 : vector<128x64xf32>
    %22 = vector.extract_strided_slice %14 {offsets = [1, 0], sizes = [1, 64], strides = [1, 1]} : vector<2x64xf32> to vector<1x64xf32>
    %23 = vector.broadcast %22 : vector<1x64xf32> to vector<128x64xf32>
    %24 = arith.addf %21, %23 : vector<128x64xf32>
    %cst_10 = arith.constant 0.000000e+00 : f32
    %25 = vector.broadcast %cst_10 : f32 to vector<128x64xf32>
    %26 = arith.maximumf %24, %25 : vector<128x64xf32>
    %c0_11 = arith.constant 0 : index
    %c0_12 = arith.constant 0 : index
    %27 = vector.load %arg3[%c0_11, %c0_12] : memref<64x64xf32, #tpu.memory_space<vmem>>, vector<64x64xf32>
    %cst_13 = arith.constant dense<0.000000e+00> : vector<128x64xf32>
    %28 = tpu.matmul %26, %27, %cst_13 {dimension_numbers = #tpu.dot_dimension_numbers<[1], [0], [0], [1], [0, 0, 1, 1], [], []>} : vector<128x64xf32>, vector<64x64xf32>, vector<128x64xf32> -> vector<128x64xf32>
    %cst_14 = arith.constant dense<0.000000e+00> : vector<64xf32>
    %29 = vector.multi_reduction <add>, %28, %cst_14 [0] : vector<128x64xf32> to vector<64xf32>
    %30 = vector.shape_cast %29 : vector<64xf32> to vector<1x64xf32>
    %cst_15 = arith.constant 1.280000e+02 : f32
    %31 = vector.broadcast %cst_15 : f32 to vector<1x64xf32>
    %32 = arith.divf %30, %31 : vector<1x64xf32>
    %33 = vector.broadcast %32 : vector<1x64xf32> to vector<128x64xf32>
    %34 = arith.subf %28, %33 : vector<128x64xf32>
    %35 = arith.mulf %34, %34 : vector<128x64xf32>
    %cst_16 = arith.constant dense<0.000000e+00> : vector<64xf32>
    %36 = vector.multi_reduction <add>, %35, %cst_16 [0] : vector<128x64xf32> to vector<64xf32>
    %37 = vector.shape_cast %36 : vector<64xf32> to vector<1x64xf32>
    %cst_17 = arith.constant 1.280000e+02 : f32
    %38 = vector.broadcast %cst_17 : f32 to vector<1x64xf32>
    %39 = arith.divf %37, %38 : vector<1x64xf32>
    %c0_18 = arith.constant 0 : index
    %c0_19 = arith.constant 0 : index
    %40 = vector.load %arg4[%c0_18, %c0_19] : memref<2x64xf32, #tpu.memory_space<vmem>>, vector<2x64xf32>
    %41 = vector.extract_strided_slice %40 {offsets = [0, 0], sizes = [1, 64], strides = [1, 1]} : vector<2x64xf32> to vector<1x64xf32>
    %cst_20 = arith.constant 9.99999974E-6 : f32
    %42 = vector.broadcast %cst_20 : f32 to vector<1x64xf32>
    %43 = arith.addf %39, %42 : vector<1x64xf32>
    %44 = math.rsqrt %43 : vector<1x64xf32>
    %45 = arith.mulf %41, %44 : vector<1x64xf32>
    %46 = vector.broadcast %45 : vector<1x64xf32> to vector<128x64xf32>
    %47 = arith.mulf %34, %46 : vector<128x64xf32>
    %48 = vector.extract_strided_slice %40 {offsets = [1, 0], sizes = [1, 64], strides = [1, 1]} : vector<2x64xf32> to vector<1x64xf32>
    %49 = vector.broadcast %48 : vector<1x64xf32> to vector<128x64xf32>
    %50 = arith.addf %47, %49 : vector<128x64xf32>
    %cst_21 = arith.constant 0.000000e+00 : f32
    %51 = vector.broadcast %cst_21 : f32 to vector<128x64xf32>
    %52 = arith.maximumf %50, %51 : vector<128x64xf32>
    %c0_22 = arith.constant 0 : index
    %c0_23 = arith.constant 0 : index
    %53 = vector.load %arg5[%c0_22, %c0_23] : memref<64x128xf32, #tpu.memory_space<vmem>>, vector<64x128xf32>
    %cst_24 = arith.constant dense<0.000000e+00> : vector<128x128xf32>
    %54 = tpu.matmul %52, %53, %cst_24 {dimension_numbers = #tpu.dot_dimension_numbers<[1], [0], [0], [1], [0, 0, 1, 1], [], []>} : vector<128x64xf32>, vector<64x128xf32>, vector<128x128xf32> -> vector<128x128xf32>
    %c0_25 = arith.constant 0 : index
    %c0_26 = arith.constant 0 : index
    %55 = vector.load %arg6[%c0_25, %c0_26] : memref<1x128xf32, #tpu.memory_space<vmem>>, vector<1x128xf32>
    %56 = vector.broadcast %55 : vector<1x128xf32> to vector<128x128xf32>
    %57 = arith.addf %54, %56 : vector<128x128xf32>
    %c0_27 = arith.constant 0 : index
    %c0_28 = arith.constant 0 : index
    %58 = vector.load %arg7[%c0_27, %c0_28] : memref<128x128xf32, #tpu.memory_space<vmem>>, vector<128x128xf32>
    tpu.vector_store %arg7[%c0_27, %c0_28], %57 {strides = array<i32>} : memref<128x128xf32, #tpu.memory_space<vmem>>, vector<128x128xf32>,
    return
  }
}

</mosaic_0001>

<llo_original>
// kernel: tpu_custom_call.1
$region0: #{tpu_custom_call.1}
  #allocation0 [shape = 'u32[]', space=smem, size = 0x4, offset = 0x4, fixed_abs, tag = 'smem constant byte address 0x4 - core index']
  #allocation1 [shape = 'u32[144,128]{1,0:T(1,128)}', space=vmem, size = 0x12000, scoped, tag = 'internal scratch']
  %s0 = inlined_call_operand.vmem [shape: f32[128,32], index: 0, kind: input, shape index: {}]
  %s1 = inlined_call_operand.vmem [shape: f32[32,64], index: 1, kind: input, shape index: {}]
  %s2 = inlined_call_operand.vmem [shape: f32[2,64], index: 2, kind: input, shape index: {}]
  %s3 = inlined_call_operand.vmem [shape: f32[64,64], index: 3, kind: input, shape index: {}]
  %s4 = inlined_call_operand.vmem [shape: f32[2,64], index: 4, kind: input, shape index: {}]
  %s5 = inlined_call_operand.vmem [shape: f32[64,128], index: 5, kind: input, shape index: {}]
  %s6 = inlined_call_operand.vmem [shape: f32[1,128], index: 6, kind: input, shape index: {}]
  %s7 = inlined_call_operand.hbm [shape: f32[128,128], index: 7, kind: output, shape index: {}]
  %s8 = sld [smem:[#allocation0]]
  $region38: #{tpu_custom_call.1} parent=0
    _
  %s10 = ssub.s32 1, %s8
  %s11 = scalar_select 0, %s10, %s8
  $region1: #{tpu_custom_call.1} parent=0
    #allocation2 [shape = 'u8[65536]{0}', space=vmem, size = 0x10000, scoped, tag = 'output window, operand 0, single buffered']
    #allocation3 [shape = 's32[1]{0}', space=sflag, size = 0x4, scoped, tag = 'scoped memory for tpu_custom_call.1']
    %12 = vsyncpa [#allocation3], 0
    // Predicated region
    $region2: #{tpu_custom_call.1} parent=1 // pred_check
      _
    $region3: #{tpu_custom_call.1} parent=1 // pred_check_branch
      %14 = sbr.rel (0) target = $region5
    $region4: #{tpu_custom_call.1} parent=1 // pred_region
      _
    $region5: #{tpu_custom_call.1} parent=1 // pred_fallthru
      _
    // Predicated region
    $region6: #{tpu_custom_call.1} parent=1 // pred_check
      _
    $region7: #{tpu_custom_call.1} parent=1 // pred_check_branch
      %16 = sbr.rel (0) target = $region9
    $region8: #{tpu_custom_call.1} parent=1 // pred_region
      _
    $region9: #{tpu_custom_call.1} parent=1 // pred_fallthru
      _
    // Predicated region
    $region10: #{tpu_custom_call.1} parent=1 // pred_check
      _
    $region11: #{tpu_custom_call.1} parent=1 // pred_check_branch
      %18 = sbr.rel (0) target = $region13
    $region12: #{tpu_custom_call.1} parent=1 // pred_region
      _
    $region13: #{tpu_custom_call.1} parent=1 // pred_fallthru
      _
    // Predicated region
    $region14: #{tpu_custom_call.1} parent=1 // pred_check
      _
    $region15: #{tpu_custom_call.1} parent=1 // pred_check_branch
      %20 = sbr.rel (0) target = $region17
    $region16: #{tpu_custom_call.1} parent=1 // pred_region
      _
    $region17: #{tpu_custom_call.1} parent=1 // pred_fallthru
      _
    // Predicated region
    $region18: #{tpu_custom_call.1} parent=1 // pred_check
      _
    $region19: #{tpu_custom_call.1} parent=1 // pred_check_branch
      %22 = sbr.rel (0) target = $region21
    $region20: #{tpu_custom_call.1} parent=1 // pred_region
      _
    $region21: #{tpu_custom_call.1} parent=1 // pred_fallthru
      _
    // Predicated region
    $region22: #{tpu_custom_call.1} parent=1 // pred_check
      _
    $region23: #{tpu_custom_call.1} parent=1 // pred_check_branch
      %24 = sbr.rel (0) target = $region25
    $region24: #{tpu_custom_call.1} parent=1 // pred_region
      _
    $region25: #{tpu_custom_call.1} parent=1 // pred_fallthru
      _
    // Predicated region
    $region26: #{tpu_custom_call.1} parent=1 // pred_check
      _
    $region27: #{tpu_custom_call.1} parent=1 // pred_check_branch
      %26 = sbr.rel (0) target = $region29
    $region28: #{tpu_custom_call.1} parent=1 // pred_region
      _
    $region29: #{tpu_custom_call.1} parent=1 // pred_fallthru
      _
    %v27 = vld [vmem:[%s0] sm:$0xff]
    %v28 = vld [vmem:[%s0 + $0x8] sm:$0xff]
    %v29 = vld [vmem:[%s0 + $0x10] sm:$0xff]
    %v30 = vld [vmem:[%s0 + $0x18] sm:$0xff]
    %v31 = vld [vmem:[%s0 + $0x20] sm:$0xff]
    %v32 = vld [vmem:[%s0 + $0x28] sm:$0xff]
    %v33 = vld [vmem:[%s0 + $0x30] sm:$0xff]
    %v34 = vld [vmem:[%s0 + $0x38] sm:$0xff]
    %v35 = vld [vmem:[%s0 + $0x40] sm:$0xff]
    %v36 = vld [vmem:[%s0 + $0x48] sm:$0xff]
    %v37 = vld [vmem:[%s0 + $0x50] sm:$0xff]
    %v38 = vld [vmem:[%s0 + $0x58] sm:$0xff]
    %v39 = vld [vmem:[%s0 + $0x60] sm:$0xff]
    %v40 = vld [vmem:[%s0 + $0x68] sm:$0xff]
    %v41 = vld [vmem:[%s0 + $0x70] sm:$0xff]
    %v42 = vld [vmem:[%s0 + $0x78] sm:$0xff]
    %v43 = vld [vmem:[%s1] sm:$0xff]
    %v44 = vld [vmem:[%s1 + $0x8] sm:$0xff]
    %v45 = vld [vmem:[%s1 + $0x10] sm:$0xff]
    %v46 = vld [vmem:[%s1 + $0x18] sm:$0xff]
    %vm47 = vcmask 261120
    %v49 = vsel %vm47, %v27, 0
    %v52 = vsel %vm47, %v28, 0
    %v55 = vsel %vm47, %v29, 0
    %v58 = vsel %vm47, %v30, 0
    %v61 = vsel %vm47, %v31, 0
    %v64 = vsel %vm47, %v32, 0
    %v67 = vsel %vm47, %v33, 0
    %v70 = vsel %vm47, %v34, 0
    %v73 = vsel %vm47, %v35, 0
    %v76 = vsel %vm47, %v36, 0
    %v79 = vsel %vm47, %v37, 0
    %v82 = vsel %vm47, %v38, 0
    %v85 = vsel %vm47, %v39, 0
    %v88 = vsel %vm47, %v40, 0
    %v91 = vsel %vm47, %v41, 0
    %v94 = vsel %vm47, %v42, 0
    %96 = vmatprep.subr.mxu0 0.0
    %97 = vmatpush1.msra.mxu0 0.0
    %98 = vmatprep.subr.mxu0 0.0
    %99 = vmatpush1.msra.mxu0 0.0
    %100 = vmatprep.subr.mxu0 0.0
    %101 = vmatpush1.msra.mxu0 0.0
    %102 = vmatprep.subr.mxu0 0.0
    %103 = vmatpush1.msra.mxu0 0.0
    %104 = vmatprep.subr.mxu0 0.0
    %105 = vmatpush1.msra.mxu0 0.0
    %106 = vmatprep.subr.mxu0 0.0
    %107 = vmatpush1.msra.mxu0 0.0
    %108 = vmatprep.subr.mxu0 0.0
    %109 = vmatpush1.msra.mxu0 0.0
    %110 = vmatprep.subr.mxu0 0.0
    %111 = vmatpush1.msra.mxu0 0.0
    %112 = vmatprep.subr.mxu0 0.0
    %113 = vmatpush1.msra.mxu0 0.0
    %114 = vmatprep.subr.mxu0 0.0
    %115 = vmatpush1.msra.mxu0 0.0
    %116 = vmatprep.subr.mxu0 0.0
    %117 = vmatpush1.msra.mxu0 0.0
    %118 = vmatprep.subr.mxu0 0.0
    %119 = vmatpush1.msra.mxu0 0.0
    %120 = vmatprep.subr.mxu0 0.0
    %121 = vmatpush1.msra.mxu0 %v46
    %122 = vmatprep.subr.mxu0 0.0
    %123 = vmatpush1.msra.mxu0 %v45
    %124 = vmatprep.subr.mxu0 0.0
    %125 = vmatpush1.msra.mxu0 %v44
    %126 = vmatprep.subr.mxu0 0.0
    %127 = vmatpush1.msra.mxu0 %v43
    %128 = vmatprep.subr.mxu0 0.0
    %129 = vmatpush2.msra.mxu0 0.0
    %130 = vmatprep.subr.mxu0 0.0
    %131 = vmatpush2.msra.mxu0 0.0
    %132 = vmatprep.subr.mxu0 0.0
    %133 = vmatpush2.msra.mxu0 0.0
    %134 = vmatprep.subr.mxu0 0.0
    %135 = vmatpush2.msra.mxu0 0.0
    %136 = vmatprep.subr.mxu0 0.0
    %137 = vmatpush2.msra.mxu0 0.0
    %138 = vmatprep.subr.mxu0 0.0
    %139 = vmatpush2.msra.mxu0 0.0
    %140 = vmatprep.subr.mxu0 0.0
    %141 = vmatpush2.msra.mxu0 0.0
    %142 = vmatprep.subr.mxu0 0.0
    %143 = vmatpush2.msra.mxu0 0.0
    %144 = vmatprep.subr.mxu0 0.0
    %145 = vmatpush2.msra.mxu0 0.0
    %146 = vmatprep.subr.mxu0 0.0
    %147 = vmatpush2.msra.mxu0 0.0
    %148 = vmatprep.subr.mxu0 0.0
    %149 = vmatpush2.msra.mxu0 0.0
    %150 = vmatprep.subr.mxu0 0.0
    %151 = vmatpush2.msra.mxu0 0.0
    %152 = vmatprep.subr.mxu0 0.0
    %153 = vmatpush2.msra.mxu0 0.0
    %154 = vmatprep.subr.mxu0 0.0
    %155 = vmatpush2.msra.mxu0 0.0
    %156 = vmatprep.subr.mxu0 0.0
    %157 = vmatpush2.msra.mxu0 0.0
    %158 = vmatprep.subr.mxu0 0.0
    %159 = vmatpush2.msra.mxu0 0.0
    %160 = vmatprep.mubr.f32.mxu0 0.0
    %161 = vmatmul.mubr.f32.gmra.mxu0 %v49
    %v162 = vpop.f32.mrf.mxu0
    %v163 = vadd.f32 0.0, %v162
    %v164 = vpop.f32.mrf.mxu0
    %165 = vmatprep.mubr.f32.mxu0 0.0
    %166 = vmatmul.mubr.f32.gmra.mxu0 %v52
    %v167 = vpop.f32.mrf.mxu0
    %v168 = vadd.f32 0.0, %v167
    %v169 = vpop.f32.mrf.mxu0
    %170 = vmatprep.mubr.f32.mxu0 0.0
    %171 = vmatmul.mubr.f32.gmra.mxu0 %v55
    %v172 = vpop.f32.mrf.mxu0
    %v173 = vadd.f32 0.0, %v172
    %v174 = vpop.f32.mrf.mxu0
    %175 = vmatprep.mubr.f32.mxu0 0.0
    %176 = vmatmul.mubr.f32.gmra.mxu0 %v58
    %v177 = vpop.f32.mrf.mxu0
    %v178 = vadd.f32 0.0, %v177
    %v179 = vpop.f32.mrf.mxu0
    %180 = vmatprep.mubr.f32.mxu0 0.0
    %181 = vmatmul.mubr.f32.gmra.mxu0 %v61
    %v182 = vpop.f32.mrf.mxu0
    %v183 = vadd.f32 0.0, %v182
    %v184 = vpop.f32.mrf.mxu0
    %185 = vmatprep.mubr.f32.mxu0 0.0
    %186 = vmatmul.mubr.f32.gmra.mxu0 %v64
    %v187 = vpop.f32.mrf.mxu0
    %v188 = vadd.f32 0.0, %v187
    %v189 = vpop.f32.mrf.mxu0
    %190 = vmatprep.mubr.f32.mxu0 0.0
    %191 = vmatmul.mubr.f32.gmra.mxu0 %v67
    %v192 = vpop.f32.mrf.mxu0
    %v193 = vadd.f32 0.0, %v192
    %v194 = vpop.f32.mrf.mxu0
    %195 = vmatprep.mubr.f32.mxu0 0.0
    %196 = vmatmul.mubr.f32.gmra.mxu0 %v70
    %v197 = vpop.f32.mrf.mxu0
    %v198 = vadd.f32 0.0, %v197
    %v199 = vpop.f32.mrf.mxu0
    %200 = vmatprep.mubr.f32.mxu0 0.0
    %201 = vmatmul.mubr.f32.gmra.mxu0 %v73
    %v202 = vpop.f32.mrf.mxu0
    %v203 = vadd.f32 0.0, %v202
    %v204 = vpop.f32.mrf.mxu0
    %205 = vmatprep.mubr.f32.mxu0 0.0
    %206 = vmatmul.mubr.f32.gmra.mxu0 %v76
    %v207 = vpop.f32.mrf.mxu0
    %v208 = vadd.f32 0.0, %v207
    %v209 = vpop.f32.mrf.mxu0
    %210 = vmatprep.mubr.f32.mxu0 0.0
    %211 = vmatmul.mubr.f32.gmra.mxu0 %v79
    %v212 = vpop.f32.mrf.mxu0
    %v213 = vadd.f32 0.0, %v212
    %v214 = vpop.f32.mrf.mxu0
    %215 = vmatprep.mubr.f32.mxu0 0.0
    %216 = vmatmul.mubr.f32.gmra.mxu0 %v82
    %v217 = vpop.f32.mrf.mxu0
    %v218 = vadd.f32 0.0, %v217
    %v219 = vpop.f32.mrf.mxu0
    %220 = vmatprep.mubr.f32.mxu0 0.0
    %221 = vmatmul.mubr.f32.gmra.mxu0 %v85
    %v222 = vpop.f32.mrf.mxu0
    %v223 = vadd.f32 0.0, %v222
    %v224 = vpop.f32.mrf.mxu0
    %225 = vmatprep.mubr.f32.mxu0 0.0
    %226 = vmatmul.mubr.f32.gmra.mxu0 %v88
    %v227 = vpop.f32.mrf.mxu0
    %v228 = vadd.f32 0.0, %v227
    %v229 = vpop.f32.mrf.mxu0
    %230 = vmatprep.mubr.f32.mxu0 0.0
    %231 = vmatmul.mubr.f32.gmra.mxu0 %v91
    %v232 = vpop.f32.mrf.mxu0
    %v233 = vadd.f32 0.0, %v232
    %v234 = vpop.f32.mrf.mxu0
    %235 = vmatprep.mubr.f32.mxu0 0.0
    %236 = vmatmul.mubr.f32.gmra.mxu0 %v94
    %v237 = vpop.f32.mrf.mxu0
    %v238 = vadd.f32 0.0, %v237
    %v239 = vpop.f32.mrf.mxu0
    %240 = vdwg.mxu0
    %vm241 = vcmask 523264
    %v242 = vsel %vm241, %v163, 0.0
    %v243 = vsel %vm241, %v168, 0.0
    %v244 = vadd.f32 %v242, %v243
    %v245 = vsel %vm241, %v173, 0.0
    %v246 = vadd.f32 %v244, %v245
    %v247 = vsel %vm241, %v178, 0.0
    %v248 = vadd.f32 %v246, %v247
    %v249 = vsel %vm241, %v183, 0.0
    %v250 = vadd.f32 %v248, %v249
    %v251 = vsel %vm241, %v188, 0.0
    %v252 = vadd.f32 %v250, %v251
    %v253 = vsel %vm241, %v193, 0.0
    %v254 = vadd.f32 %v252, %v253
    %v255 = vsel %vm241, %v198, 0.0
    %v256 = vadd.f32 %v254, %v255
    %v257 = vsel %vm241, %v203, 0.0
    %v258 = vadd.f32 %v256, %v257
    %v259 = vsel %vm241, %v208, 0.0
    %v260 = vadd.f32 %v258, %v259
    %v261 = vsel %vm241, %v213, 0.0
    %v262 = vadd.f32 %v260, %v261
    %v263 = vsel %vm241, %v218, 0.0
    %v264 = vadd.f32 %v262, %v263
    %v265 = vsel %vm241, %v223, 0.0
    %v266 = vadd.f32 %v264, %v265
    %v267 = vsel %vm241, %v228, 0.0
    %v268 = vadd.f32 %v266, %v267
    %v269 = vsel %vm241, %v233, 0.0
    %v270 = vadd.f32 %v268, %v269
    %v271 = vsel %vm241, %v238, 0.0
    %v272 = vadd.f32 %v270, %v271
    %v273 = vrot.slane %v272, 4
    %v274 = vadd.f32 %v272, %v273
    %v275 = vrot.slane %v274, 2
    %v276 = vadd.f32 %v274, %v275
    %v277 = vrot.slane %v276, 1
    %v278 = vadd.f32 %v276, %v277
    %v279 = vrcp.pop 128.0
    %v280 = vmul.f32 %v278, %v279
    %v281 = vsub.f32 %v163, %v280
    %v282 = vsub.f32 %v168, %v280
    %v283 = vsub.f32 %v173, %v280
    %v284 = vsub.f32 %v178, %v280
    %v285 = vsub.f32 %v183, %v280
    %v286 = vsub.f32 %v188, %v280
    %v287 = vsub.f32 %v193, %v280
    %v288 = vsub.f32 %v198, %v280
    %v289 = vsub.f32 %v203, %v280
    %v290 = vsub.f32 %v208, %v280
    %v291 = vsub.f32 %v213, %v280
    %v292 = vsub.f32 %v218, %v280
    %v293 = vsub.f32 %v223, %v280
    %v294 = vsub.f32 %v228, %v280
    %v295 = vsub.f32 %v233, %v280
    %v296 = vsub.f32 %v238, %v280
    %v297 = vmul.f32 %v281, %v281
    %v298 = vmul.f32 %v282, %v282
    %v299 = vmul.f32 %v283, %v283
    %v300 = vmul.f32 %v284, %v284
    %v301 = vmul.f32 %v285, %v285
    %v302 = vmul.f32 %v286, %v286
    %v303 = vmul.f32 %v287, %v287
    %v304 = vmul.f32 %v288, %v288
    %v305 = vmul.f32 %v289, %v289
    %v306 = vmul.f32 %v290, %v290
    %v307 = vmul.f32 %v291, %v291
    %v308 = vmul.f32 %v292, %v292
    %v309 = vmul.f32 %v293, %v293
    %v310 = vmul.f32 %v294, %v294
    %v311 = vmul.f32 %v295, %v295
    %v312 = vmul.f32 %v296, %v296
    %v313 = vsel %vm241, %v297, 0.0
    %v314 = vsel %vm241, %v298, 0.0
    %v315 = vadd.f32 %v313, %v314
    %v316 = vsel %vm241, %v299, 0.0
    %v317 = vadd.f32 %v315, %v316
    %v318 = vsel %vm241, %v300, 0.0
    %v319 = vadd.f32 %v317, %v318
    %v320 = vsel %vm241, %v301, 0.0
    %v321 = vadd.f32 %v319, %v320
    %v322 = vsel %vm241, %v302, 0.0
    %v323 = vadd.f32 %v321, %v322
    %v324 = vsel %vm241, %v303, 0.0
    %v325 = vadd.f32 %v323, %v324
    %v326 = vsel %vm241, %v304, 0.0
    %v327 = vadd.f32 %v325, %v326
    %v328 = vsel %vm241, %v305, 0.0
    %v329 = vadd.f32 %v327, %v328
    %v330 = vsel %vm241, %v306, 0.0
    %v331 = vadd.f32 %v329, %v330
    %v332 = vsel %vm241, %v307, 0.0
    %v333 = vadd.f32 %v331, %v332
    %v334 = vsel %vm241, %v308, 0.0
    %v335 = vadd.f32 %v333, %v334
    %v336 = vsel %vm241, %v309, 0.0
    %v337 = vadd.f32 %v335, %v336
    %v338 = vsel %vm241, %v310, 0.0
    %v339 = vadd.f32 %v337, %v338
    %v340 = vsel %vm241, %v311, 0.0
    %v341 = vadd.f32 %v339, %v340
    %v342 = vsel %vm241, %v312, 0.0
    %v343 = vadd.f32 %v341, %v342
    %v344 = vrot.slane %v343, 4
    %v345 = vadd.f32 %v343, %v344
    %v346 = vrot.slane %v345, 2
    %v347 = vadd.f32 %v345, %v346
    %v348 = vrot.slane %v347, 1
    %v349 = vadd.f32 %v347, %v348
    %v350 = vmul.f32 %v349, %v279
    %v351 = vld [vmem:[%s2] sm:$0x3]
    %v352 = vadd.f32 %v350, 1e-05
    %v353 = vrsqrt.pop %v352
    %v354 = vmul.f32 %v351, %v353
    %v355 = vlaneseq
    %v356 = vshrl.u32 %v355, 7
    %v357 = vsub.s32 0, %v356
    %v358 = vrot.slane %v354, %v357
    %v359 = vmul.f32 %v281, %v358
    %v360 = vmul.f32 %v282, %v358
    %v361 = vmul.f32 %v283, %v358
    %v362 = vmul.f32 %v284, %v358
    %v363 = vmul.f32 %v285, %v358
    %v364 = vmul.f32 %v286, %v358
    %v365 = vmul.f32 %v287, %v358
    %v366 = vmul.f32 %v288, %v358
    %v367 = vmul.f32 %v289, %v358
    %v368 = vmul.f32 %v290, %v358
    %v369 = vmul.f32 %v291, %v358
    %v370 = vmul.f32 %v292, %v358
    %v371 = vmul.f32 %v293, %v358
    %v372 = vmul.f32 %v294, %v358
    %v373 = vmul.f32 %v295, %v358
    %v374 = vmul.f32 %v296, %v358
    %v375 = vlaneseq
    %v376 = vshrl.u32 %v375, 7
    %v377 = vsub.s32 1, %v376
    %v378 = vrot.slane %v351, %v377
    %v379 = vadd.f32 %v359, %v378
    %v380 = vadd.f32 %v360, %v378
    %v381 = vadd.f32 %v361, %v378
    %v382 = vadd.f32 %v362, %v378
    %v383 = vadd.f32 %v363, %v378
    %v384 = vadd.f32 %v364, %v378
    %v385 = vadd.f32 %v365, %v378
    %v386 = vadd.f32 %v366, %v378
    %v387 = vadd.f32 %v367, %v378
    %v388 = vadd.f32 %v368, %v378
    %v389 = vadd.f32 %v369, %v378
    %v390 = vadd.f32 %v370, %v378
    %v391 = vadd.f32 %v371, %v378
    %v392 = vadd.f32 %v372, %v378
    %v393 = vadd.f32 %v373, %v378
    %v394 = vadd.f32 %v374, %v378
    %v395 = vmax.f32 %v379, 0.0
    %v396 = vmax.f32 %v380, 0.0
    %v397 = vmax.f32 %v381, 0.0
    %v398 = vmax.f32 %v382, 0.0
    %v399 = vmax.f32 %v383, 0.0
    %v400 = vmax.f32 %v384, 0.0
    %v401 = vmax.f32 %v385, 0.0
    %v402 = vmax.f32 %v386, 0.0
    %v403 = vmax.f32 %v387, 0.0
    %v404 = vmax.f32 %v388, 0.0
    %v405 = vmax.f32 %v389, 0.0
    %v406 = vmax.f32 %v390, 0.0
    %v407 = vmax.f32 %v391, 0.0
    %v408 = vmax.f32 %v392, 0.0
    %v409 = vmax.f32 %v393, 0.0
    %v410 = vmax.f32 %v394, 0.0
    %v411 = vld [vmem:[%s3] sm:$0xff]
    %v412 = vld [vmem:[%s3 + $0x8] sm:$0xff]
    %v413 = vld [vmem:[%s3 + $0x10] sm:$0xff]
    %v414 = vld [vmem:[%s3 + $0x18] sm:$0xff]
    %v415 = vld [vmem:[%s3 + $0x20] sm:$0xff]
    %v416 = vld [vmem:[%s3 + $0x28] sm:$0xff]
    %v417 = vld [vmem:[%s3 + $0x30] sm:$0xff]
    %v418 = vld [vmem:[%s3 + $0x38] sm:$0xff]
    %v420 = vsel %vm241, %v395, 0
    %v423 = vsel %vm241, %v396, 0
    %v426 = vsel %vm241, %v397, 0
    %v429 = vsel %vm241, %v398, 0
    %v432 = vsel %vm241, %v399, 0
    %v435 = vsel %vm241, %v400, 0
    %v438 = vsel %vm241, %v401, 0
    %v441 = vsel %vm241, %v402, 0
    %v444 = vsel %vm241, %v403, 0
    %v447 = vsel %vm241, %v404, 0
    %v450 = vsel %vm241, %v405, 0
    %v453 = vsel %vm241, %v406, 0
    %v456 = vsel %vm241, %v407, 0
    %v459 = vsel %vm241, %v408, 0
    %v462 = vsel %vm241, %v409, 0
    %v465 = vsel %vm241, %v410, 0
    %467 = vmatprep.subr.mxu0 0.0
    %468 = vmatpush1.msra.mxu0 0.0
    %469 = vmatprep.subr.mxu0 0.0
    %470 = vmatpush1.msra.mxu0 0.0
    %471 = vmatprep.subr.mxu0 0.0
    %472 = vmatpush1.msra.mxu0 0.0
    %473 = vmatprep.subr.mxu0 0.0
    %474 = vmatpush1.msra.mxu0 0.0
    %475 = vmatprep.subr.mxu0 0.0
    %476 = vmatpush1.msra.mxu0 0.0
    %477 = vmatprep.subr.mxu0 0.0
    %478 = vmatpush1.msra.mxu0 0.0
    %479 = vmatprep.subr.mxu0 0.0
    %480 = vmatpush1.msra.mxu0 0.0
    %481 = vmatprep.subr.mxu0 0.0
    %482 = vmatpush1.msra.mxu0 0.0
    %483 = vmatprep.subr.mxu0 0.0
    %484 = vmatpush1.msra.mxu0 %v418
    %485 = vmatprep.subr.mxu0 0.0
    %486 = vmatpush1.msra.mxu0 %v417
    %487 = vmatprep.subr.mxu0 0.0
    %488 = vmatpush1.msra.mxu0 %v416
    %489 = vmatprep.subr.mxu0 0.0
    %490 = vmatpush1.msra.mxu0 %v415
    %491 = vmatprep.subr.mxu0 0.0
    %492 = vmatpush1.msra.mxu0 %v414
    %493 = vmatprep.subr.mxu0 0.0
    %494 = vmatpush1.msra.mxu0 %v413
    %495 = vmatprep.subr.mxu0 0.0
    %496 = vmatpush1.msra.mxu0 %v412
    %497 = vmatprep.subr.mxu0 0.0
    %498 = vmatpush1.msra.mxu0 %v411
    %499 = vmatprep.subr.mxu0 0.0
    %500 = vmatpush2.msra.mxu0 0.0
    %501 = vmatprep.subr.mxu0 0.0
    %502 = vmatpush2.msra.mxu0 0.0
    %503 = vmatprep.subr.mxu0 0.0
    %504 = vmatpush2.msra.mxu0 0.0
    %505 = vmatprep.subr.mxu0 0.0
    %506 = vmatpush2.msra.mxu0 0.0
    %507 = vmatprep.subr.mxu0 0.0
    %508 = vmatpush2.msra.mxu0 0.0
    %509 = vmatprep.subr.mxu0 0.0
    %510 = vmatpush2.msra.mxu0 0.0
    %511 = vmatprep.subr.mxu0 0.0
    %512 = vmatpush2.msra.mxu0 0.0
    %513 = vmatprep.subr.mxu0 0.0
    %514 = vmatpush2.msra.mxu0 0.0
    %515 = vmatprep.subr.mxu0 0.0
    %516 = vmatpush2.msra.mxu0 0.0
    %517 = vmatprep.subr.mxu0 0.0
    %518 = vmatpush2.msra.mxu0 0.0
    %519 = vmatprep.subr.mxu0 0.0
    %520 = vmatpush2.msra.mxu0 0.0
    %521 = vmatprep.subr.mxu0 0.0
    %522 = vmatpush2.msra.mxu0 0.0
    %523 = vmatprep.subr.mxu0 0.0
    %524 = vmatpush2.msra.mxu0 0.0
    %525 = vmatprep.subr.mxu0 0.0
    %526 = vmatpush2.msra.mxu0 0.0
    %527 = vmatprep.subr.mxu0 0.0
    %528 = vmatpush2.msra.mxu0 0.0
    %529 = vmatprep.subr.mxu0 0.0
    %530 = vmatpush2.msra.mxu0 0.0
    %531 = vmatprep.mubr.f32.mxu0 0.0
    %532 = vmatmul.mubr.f32.gmra.mxu0 %v420
    %v533 = vpop.f32.mrf.mxu0
    %v534 = vadd.f32 0.0, %v533
    %v535 = vpop.f32.mrf.mxu0
    %536 = vmatprep.mubr.f32.mxu0 0.0
    %537 = vmatmul.mubr.f32.gmra.mxu0 %v423
    %v538 = vpop.f32.mrf.mxu0
    %v539 = vadd.f32 0.0, %v538
    %v540 = vpop.f32.mrf.mxu0
    %541 = vmatprep.mubr.f32.mxu0 0.0
    %542 = vmatmul.mubr.f32.gmra.mxu0 %v426
    %v543 = vpop.f32.mrf.mxu0
    %v544 = vadd.f32 0.0, %v543
    %v545 = vpop.f32.mrf.mxu0
    %546 = vmatprep.mubr.f32.mxu0 0.0
    %547 = vmatmul.mubr.f32.gmra.mxu0 %v429
    %v548 = vpop.f32.mrf.mxu0
    %v549 = vadd.f32 0.0, %v548
    %v550 = vpop.f32.mrf.mxu0
    %551 = vmatprep.mubr.f32.mxu0 0.0
    %552 = vmatmul.mubr.f32.gmra.mxu0 %v432
    %v553 = vpop.f32.mrf.mxu0
    %v554 = vadd.f32 0.0, %v553
    %v555 = vpop.f32.mrf.mxu0
    %556 = vmatprep.mubr.f32.mxu0 0.0
    %557 = vmatmul.mubr.f32.gmra.mxu0 %v435
    %v558 = vpop.f32.mrf.mxu0
    %v559 = vadd.f32 0.0, %v558
    %v560 = vpop.f32.mrf.mxu0
    %561 = vmatprep.mubr.f32.mxu0 0.0
    %562 = vmatmul.mubr.f32.gmra.mxu0 %v438
    %v563 = vpop.f32.mrf.mxu0
    %v564 = vadd.f32 0.0, %v563
    %v565 = vpop.f32.mrf.mxu0
    %566 = vmatprep.mubr.f32.mxu0 0.0
    %567 = vmatmul.mubr.f32.gmra.mxu0 %v441
    %v568 = vpop.f32.mrf.mxu0
    %v569 = vadd.f32 0.0, %v568
    %v570 = vpop.f32.mrf.mxu0
    %571 = vmatprep.mubr.f32.mxu0 0.0
    %572 = vmatmul.mubr.f32.gmra.mxu0 %v444
    %v573 = vpop.f32.mrf.mxu0
    %v574 = vadd.f32 0.0, %v573
    %v575 = vpop.f32.mrf.mxu0
    %576 = vmatprep.mubr.f32.mxu0 0.0
    %577 = vmatmul.mubr.f32.gmra.mxu0 %v447
    %v578 = vpop.f32.mrf.mxu0
    %v579 = vadd.f32 0.0, %v578
    %v580 = vpop.f32.mrf.mxu0
    %581 = vmatprep.mubr.f32.mxu0 0.0
    %582 = vmatmul.mubr.f32.gmra.mxu0 %v450
    %v583 = vpop.f32.mrf.mxu0
    %v584 = vadd.f32 0.0, %v583
    %v585 = vpop.f32.mrf.mxu0
    %586 = vmatprep.mubr.f32.mxu0 0.0
    %587 = vmatmul.mubr.f32.gmra.mxu0 %v453
    %v588 = vpop.f32.mrf.mxu0
    %v589 = vadd.f32 0.0, %v588
    %v590 = vpop.f32.mrf.mxu0
    %591 = vmatprep.mubr.f32.mxu0 0.0
    %592 = vmatmul.mubr.f32.gmra.mxu0 %v456
    %v593 = vpop.f32.mrf.mxu0
    %v594 = vadd.f32 0.0, %v593
    %v595 = vpop.f32.mrf.mxu0
    %596 = vmatprep.mubr.f32.mxu0 0.0
    %597 = vmatmul.mubr.f32.gmra.mxu0 %v459
    %v598 = vpop.f32.mrf.mxu0
    %v599 = vadd.f32 0.0, %v598
    %v600 = vpop.f32.mrf.mxu0
    %601 = vmatprep.mubr.f32.mxu0 0.0
    %602 = vmatmul.mubr.f32.gmra.mxu0 %v462
    %v603 = vpop.f32.mrf.mxu0
    %v604 = vadd.f32 0.0, %v603
    %v605 = vpop.f32.mrf.mxu0
    %606 = vmatprep.mubr.f32.mxu0 0.0
    %607 = vmatmul.mubr.f32.gmra.mxu0 %v465
    %v608 = vpop.f32.mrf.mxu0
    %v609 = vadd.f32 0.0, %v608
    %v610 = vpop.f32.mrf.mxu0
    %611 = vdwg.mxu0
    %v612 = vsel %vm241, %v534, 0.0
    %v613 = vsel %vm241, %v539, 0.0
    %v614 = vadd.f32 %v612, %v613
    %v615 = vsel %vm241, %v544, 0.0
    %v616 = vadd.f32 %v614, %v615
    %v617 = vsel %vm241, %v549, 0.0
    %v618 = vadd.f32 %v616, %v617
    %v619 = vsel %vm241, %v554, 0.0
    %v620 = vadd.f32 %v618, %v619
    %v621 = vsel %vm241, %v559, 0.0
    %v622 = vadd.f32 %v620, %v621
    %v623 = vsel %vm241, %v564, 0.0
    %v624 = vadd.f32 %v622, %v623
    %v625 = vsel %vm241, %v569, 0.0
    %v626 = vadd.f32 %v624, %v625
    %v627 = vsel %vm241, %v574, 0.0
    %v628 = vadd.f32 %v626, %v627
    %v629 = vsel %vm241, %v579, 0.0
    %v630 = vadd.f32 %v628, %v629
    %v631 = vsel %vm241, %v584, 0.0
    %v632 = vadd.f32 %v630, %v631
    %v633 = vsel %vm241, %v589, 0.0
    %v634 = vadd.f32 %v632, %v633
    %v635 = vsel %vm241, %v594, 0.0
    %v636 = vadd.f32 %v634, %v635
    %v637 = vsel %vm241, %v599, 0.0
    %v638 = vadd.f32 %v636, %v637
    %v639 = vsel %vm241, %v604, 0.0
    %v640 = vadd.f32 %v638, %v639
    %v641 = vsel %vm241, %v609, 0.0
    %v642 = vadd.f32 %v640, %v641
    %v643 = vrot.slane %v642, 4
    %v644 = vadd.f32 %v642, %v643
    %v645 = vrot.slane %v644, 2
    %v646 = vadd.f32 %v644, %v645
    %v647 = vrot.slane %v646, 1
    %v648 = vadd.f32 %v646, %v647
    %v649 = vmul.f32 %v648, %v279
    %v650 = vsub.f32 %v534, %v649
    %v651 = vsub.f32 %v539, %v649
    %v652 = vsub.f32 %v544, %v649
    %v653 = vsub.f32 %v549, %v649
    %v654 = vsub.f32 %v554, %v649
    %v655 = vsub.f32 %v559, %v649
    %v656 = vsub.f32 %v564, %v649
    %v657 = vsub.f32 %v569, %v649
    %v658 = vsub.f32 %v574, %v649
    %v659 = vsub.f32 %v579, %v649
    %v660 = vsub.f32 %v584, %v649
    %v661 = vsub.f32 %v589, %v649
    %v662 = vsub.f32 %v594, %v649
    %v663 = vsub.f32 %v599, %v649
    %v664 = vsub.f32 %v604, %v649
    %v665 = vsub.f32 %v609, %v649
    %v666 = vmul.f32 %v650, %v650
    %v667 = vmul.f32 %v651, %v651
    %v668 = vmul.f32 %v652, %v652
    %v669 = vmul.f32 %v653, %v653
    %v670 = vmul.f32 %v654, %v654
    %v671 = vmul.f32 %v655, %v655
    %v672 = vmul.f32 %v656, %v656
    %v673 = vmul.f32 %v657, %v657
    %v674 = vmul.f32 %v658, %v658
    %v675 = vmul.f32 %v659, %v659
    %v676 = vmul.f32 %v660, %v660
    %v677 = vmul.f32 %v661, %v661
    %v678 = vmul.f32 %v662, %v662
    %v679 = vmul.f32 %v663, %v663
    %v680 = vmul.f32 %v664, %v664
    %v681 = vmul.f32 %v665, %v665
    %v682 = vsel %vm241, %v666, 0.0
    %v683 = vsel %vm241, %v667, 0.0
    %v684 = vadd.f32 %v682, %v683
    %v685 = vsel %vm241, %v668, 0.0
    %v686 = vadd.f32 %v684, %v685
    %v687 = vsel %vm241, %v669, 0.0
    %v688 = vadd.f32 %v686, %v687
    %v689 = vsel %vm241, %v670, 0.0
    %v690 = vadd.f32 %v688, %v689
    %v691 = vsel %vm241, %v671, 0.0
    %v692 = vadd.f32 %v690, %v691
    %v693 = vsel %vm241, %v672, 0.0
    %v694 = vadd.f32 %v692, %v693
    %v695 = vsel %vm241, %v673, 0.0
    %v696 = vadd.f32 %v694, %v695
    %v697 = vsel %vm241, %v674, 0.0
    %v698 = vadd.f32 %v696, %v697
    %v699 = vsel %vm241, %v675, 0.0
    %v700 = vadd.f32 %v698, %v699
    %v701 = vsel %vm241, %v676, 0.0
    %v702 = vadd.f32 %v700, %v701
    %v703 = vsel %vm241, %v677, 0.0
    %v704 = vadd.f32 %v702, %v703
    %v705 = vsel %vm241, %v678, 0.0
    %v706 = vadd.f32 %v704, %v705
    %v707 = vsel %vm241, %v679, 0.0
    %v708 = vadd.f32 %v706, %v707
    %v709 = vsel %vm241, %v680, 0.0
    %v710 = vadd.f32 %v708, %v709
    %v711 = vsel %vm241, %v681, 0.0
    %v712 = vadd.f32 %v710, %v711
    %v713 = vrot.slane %v712, 4
    %v714 = vadd.f32 %v712, %v713
    %v715 = vrot.slane %v714, 2
    %v716 = vadd.f32 %v714, %v715
    %v717 = vrot.slane %v716, 1
    %v718 = vadd.f32 %v716, %v717
    %v719 = vmul.f32 %v718, %v279
    %v720 = vld [vmem:[%s4] sm:$0x3]
    %v721 = vadd.f32 %v719, 1e-05
    %v722 = vrsqrt.pop %v721
    %v723 = vmul.f32 %v720, %v722
    %v724 = vlaneseq
    %v725 = vshrl.u32 %v724, 7
    %v726 = vsub.s32 0, %v725
    %v727 = vrot.slane %v723, %v726
    %v728 = vmul.f32 %v650, %v727
    %v729 = vmul.f32 %v651, %v727
    %v730 = vmul.f32 %v652, %v727
    %v731 = vmul.f32 %v653, %v727
    %v732 = vmul.f32 %v654, %v727
    %v733 = vmul.f32 %v655, %v727
    %v734 = vmul.f32 %v656, %v727
    %v735 = vmul.f32 %v657, %v727
    %v736 = vmul.f32 %v658, %v727
    %v737 = vmul.f32 %v659, %v727
    %v738 = vmul.f32 %v660, %v727
    %v739 = vmul.f32 %v661, %v727
    %v740 = vmul.f32 %v662, %v727
    %v741 = vmul.f32 %v663, %v727
    %v742 = vmul.f32 %v664, %v727
    %v743 = vmul.f32 %v665, %v727
    %v744 = vlaneseq
    %v745 = vshrl.u32 %v744, 7
    %v746 = vsub.s32 1, %v745
    %v747 = vrot.slane %v720, %v746
    %v748 = vadd.f32 %v728, %v747
    %v749 = vadd.f32 %v729, %v747
    %v750 = vadd.f32 %v730, %v747
    %v751 = vadd.f32 %v731, %v747
    %v752 = vadd.f32 %v732, %v747
    %v753 = vadd.f32 %v733, %v747
    %v754 = vadd.f32 %v734, %v747
    %v755 = vadd.f32 %v735, %v747
    %v756 = vadd.f32 %v736, %v747
    %v757 = vadd.f32 %v737, %v747
    %v758 = vadd.f32 %v738, %v747
    %v759 = vadd.f32 %v739, %v747
    %v760 = vadd.f32 %v740, %v747
    %v761 = vadd.f32 %v741, %v747
    %v762 = vadd.f32 %v742, %v747
    %v763 = vadd.f32 %v743, %v747
    %v764 = vmax.f32 %v748, 0.0
    %v765 = vmax.f32 %v749, 0.0
    %v766 = vmax.f32 %v750, 0.0
    %v767 = vmax.f32 %v751, 0.0
    %v768 = vmax.f32 %v752, 0.0
    %v769 = vmax.f32 %v753, 0.0
    %v770 = vmax.f32 %v754, 0.0
    %v771 = vmax.f32 %v755, 0.0
    %v772 = vmax.f32 %v756, 0.0
    %v773 = vmax.f32 %v757, 0.0
    %v774 = vmax.f32 %v758, 0.0
    %v775 = vmax.f32 %v759, 0.0
    %v776 = vmax.f32 %v760, 0.0
    %v777 = vmax.f32 %v761, 0.0
    %v778 = vmax.f32 %v762, 0.0
    %v779 = vmax.f32 %v763, 0.0
    %v780 = vld [vmem:[%s5] sm:$0xff]
    %v781 = vld [vmem:[%s5 + $0x8] sm:$0xff]
    %v782 = vld [vmem:[%s5 + $0x10] sm:$0xff]
    %v783 = vld [vmem:[%s5 + $0x18] sm:$0xff]
    %v784 = vld [vmem:[%s5 + $0x20] sm:$0xff]
    %v785 = vld [vmem:[%s5 + $0x28] sm:$0xff]
    %v786 = vld [vmem:[%s5 + $0x30] sm:$0xff]
    %v787 = vld [vmem:[%s5 + $0x38] sm:$0xff]
    %v788 = vld [vmem:[%s6] sm:$0x1]
    %v790 = vlaneseq
    %v791 = vshrl.u32 %v790, 7
    %v792 = vsub.s32 0, %v791
    %v793 = vrot.slane %v788, %v792
    %v796 = vsel %vm241, %v764, 0
    %v799 = vsel %vm241, %v765, 0
    %v802 = vsel %vm241, %v766, 0
    %v805 = vsel %vm241, %v767, 0
    %v808 = vsel %vm241, %v768, 0
    %v811 = vsel %vm241, %v769, 0
    %v814 = vsel %vm241, %v770, 0
    %v817 = vsel %vm241, %v771, 0
    %v820 = vsel %vm241, %v772, 0
    %v823 = vsel %vm241, %v773, 0
    %v826 = vsel %vm241, %v774, 0
    %v829 = vsel %vm241, %v775, 0
    %v832 = vsel %vm241, %v776, 0
    %v835 = vsel %vm241, %v777, 0
    %v838 = vsel %vm241, %v778, 0
    %v841 = vsel %vm241, %v779, 0
    %843 = vmatprep.subr.mxu0 0.0
    %844 = vmatpush1.msra.mxu0 0.0
    %845 = vmatprep.subr.mxu0 0.0
    %846 = vmatpush1.msra.mxu0 0.0
    %847 = vmatprep.subr.mxu0 0.0
    %848 = vmatpush1.msra.mxu0 0.0
    %849 = vmatprep.subr.mxu0 0.0
    %850 = vmatpush1.msra.mxu0 0.0
    %851 = vmatprep.subr.mxu0 0.0
    %852 = vmatpush1.msra.mxu0 0.0
    %853 = vmatprep.subr.mxu0 0.0
    %854 = vmatpush1.msra.mxu0 0.0
    %855 = vmatprep.subr.mxu0 0.0
    %856 = vmatpush1.msra.mxu0 0.0
    %857 = vmatprep.subr.mxu0 0.0
    %858 = vmatpush1.msra.mxu0 0.0
    %859 = vmatprep.subr.mxu0 0.0
    %860 = vmatpush1.msra.mxu0 %v787
    %861 = vmatprep.subr.mxu0 0.0
    %862 = vmatpush1.msra.mxu0 %v786
    %863 = vmatprep.subr.mxu0 0.0
    %864 = vmatpush1.msra.mxu0 %v785
    %865 = vmatprep.subr.mxu0 0.0
    %866 = vmatpush1.msra.mxu0 %v784
    %867 = vmatprep.subr.mxu0 0.0
    %868 = vmatpush1.msra.mxu0 %v783
    %869 = vmatprep.subr.mxu0 0.0
    %870 = vmatpush1.msra.mxu0 %v782
    %871 = vmatprep.subr.mxu0 0.0
    %872 = vmatpush1.msra.mxu0 %v781
    %873 = vmatprep.subr.mxu0 0.0
    %874 = vmatpush1.msra.mxu0 %v780
    %875 = vmatprep.subr.mxu0 0.0
    %876 = vmatpush2.msra.mxu0 0.0
    %877 = vmatprep.subr.mxu0 0.0
    %878 = vmatpush2.msra.mxu0 0.0
    %879 = vmatprep.subr.mxu0 0.0
    %880 = vmatpush2.msra.mxu0 0.0
    %881 = vmatprep.subr.mxu0 0.0
    %882 = vmatpush2.msra.mxu0 0.0
    %883 = vmatprep.subr.mxu0 0.0
    %884 = vmatpush2.msra.mxu0 0.0
    %885 = vmatprep.subr.mxu0 0.0
    %886 = vmatpush2.msra.mxu0 0.0
    %887 = vmatprep.subr.mxu0 0.0
    %888 = vmatpush2.msra.mxu0 0.0
    %889 = vmatprep.subr.mxu0 0.0
    %890 = vmatpush2.msra.mxu0 0.0
    %891 = vmatprep.subr.mxu0 0.0
    %892 = vmatpush2.msra.mxu0 0.0
    %893 = vmatprep.subr.mxu0 0.0
    %894 = vmatpush2.msra.mxu0 0.0
    %895 = vmatprep.subr.mxu0 0.0
    %896 = vmatpush2.msra.mxu0 0.0
    %897 = vmatprep.subr.mxu0 0.0
    %898 = vmatpush2.msra.mxu0 0.0
    %899 = vmatprep.subr.mxu0 0.0
    %900 = vmatpush2.msra.mxu0 0.0
    %901 = vmatprep.subr.mxu0 0.0
    %902 = vmatpush2.msra.mxu0 0.0
    %903 = vmatprep.subr.mxu0 0.0
    %904 = vmatpush2.msra.mxu0 0.0
    %905 = vmatprep.subr.mxu0 0.0
    %906 = vmatpush2.msra.mxu0 0.0
    %907 = vmatprep.mubr.f32.mxu0 0.0
    %908 = vmatmul.mubr.f32.gmra.mxu0 %v796
    %v909 = vpop.f32.mrf.mxu0
    %v910 = vadd.f32 %v793, %v909
    %v911 = vpop.f32.mrf.mxu0
    %912 = vmatprep.mubr.f32.mxu0 0.0
    %913 = vmatmul.mubr.f32.gmra.mxu0 %v799
    %v914 = vpop.f32.mrf.mxu0
    %v915 = vadd.f32 %v793, %v914
    %v916 = vpop.f32.mrf.mxu0
    %917 = vmatprep.mubr.f32.mxu0 0.0
    %918 = vmatmul.mubr.f32.gmra.mxu0 %v802
    %v919 = vpop.f32.mrf.mxu0
    %v920 = vadd.f32 %v793, %v919
    %v921 = vpop.f32.mrf.mxu0
    %922 = vmatprep.mubr.f32.mxu0 0.0
    %923 = vmatmul.mubr.f32.gmra.mxu0 %v805
    %v924 = vpop.f32.mrf.mxu0
    %v925 = vadd.f32 %v793, %v924
    %v926 = vpop.f32.mrf.mxu0
    %927 = vmatprep.mubr.f32.mxu0 0.0
    %928 = vmatmul.mubr.f32.gmra.mxu0 %v808
    %v929 = vpop.f32.mrf.mxu0
    %v930 = vadd.f32 %v793, %v929
    %v931 = vpop.f32.mrf.mxu0
    %932 = vmatprep.mubr.f32.mxu0 0.0
    %933 = vmatmul.mubr.f32.gmra.mxu0 %v811
    %v934 = vpop.f32.mrf.mxu0
    %v935 = vadd.f32 %v793, %v934
    %v936 = vpop.f32.mrf.mxu0
    %937 = vmatprep.mubr.f32.mxu0 0.0
    %938 = vmatmul.mubr.f32.gmra.mxu0 %v814
    %v939 = vpop.f32.mrf.mxu0
    %v940 = vadd.f32 %v793, %v939
    %v941 = vpop.f32.mrf.mxu0
    %942 = vmatprep.mubr.f32.mxu0 0.0
    %943 = vmatmul.mubr.f32.gmra.mxu0 %v817
    %v944 = vpop.f32.mrf.mxu0
    %v945 = vadd.f32 %v793, %v944
    %v946 = vpop.f32.mrf.mxu0
    %947 = vmatprep.mubr.f32.mxu0 0.0
    %948 = vmatmul.mubr.f32.gmra.mxu0 %v820
    %v949 = vpop.f32.mrf.mxu0
    %v950 = vadd.f32 %v793, %v949
    %v951 = vpop.f32.mrf.mxu0
    %952 = vmatprep.mubr.f32.mxu0 0.0
    %953 = vmatmul.mubr.f32.gmra.mxu0 %v823
    %v954 = vpop.f32.mrf.mxu0
    %v955 = vadd.f32 %v793, %v954
    %v956 = vpop.f32.mrf.mxu0
    %957 = vmatprep.mubr.f32.mxu0 0.0
    %958 = vmatmul.mubr.f32.gmra.mxu0 %v826
    %v959 = vpop.f32.mrf.mxu0
    %v960 = vadd.f32 %v793, %v959
    %v961 = vpop.f32.mrf.mxu0
    %962 = vmatprep.mubr.f32.mxu0 0.0
    %963 = vmatmul.mubr.f32.gmra.mxu0 %v829
    %v964 = vpop.f32.mrf.mxu0
    %v965 = vadd.f32 %v793, %v964
    %v966 = vpop.f32.mrf.mxu0
    %967 = vmatprep.mubr.f32.mxu0 0.0
    %968 = vmatmul.mubr.f32.gmra.mxu0 %v832
    %v969 = vpop.f32.mrf.mxu0
    %v970 = vadd.f32 %v793, %v969
    %v971 = vpop.f32.mrf.mxu0
    %972 = vmatprep.mubr.f32.mxu0 0.0
    %973 = vmatmul.mubr.f32.gmra.mxu0 %v835
    %v974 = vpop.f32.mrf.mxu0
    %v975 = vadd.f32 %v793, %v974
    %v976 = vpop.f32.mrf.mxu0
    %977 = vmatprep.mubr.f32.mxu0 0.0
    %978 = vmatmul.mubr.f32.gmra.mxu0 %v838
    %v979 = vpop.f32.mrf.mxu0
    %v980 = vadd.f32 %v793, %v979
    %v981 = vpop.f32.mrf.mxu0
    %982 = vmatprep.mubr.f32.mxu0 0.0
    %983 = vmatmul.mubr.f32.gmra.mxu0 %v841
    %v984 = vpop.f32.mrf.mxu0
    %v985 = vadd.f32 %v793, %v984
    %v986 = vpop.f32.mrf.mxu0
    %987 = vdwg.mxu0
    %988 = vst [vmem:[#allocation2] sm:$0xff] %v910
    %989 = vst [vmem:[#allocation2 + $0x8] sm:$0xff] %v915
    %990 = vst [vmem:[#allocation2 + $0x10] sm:$0xff] %v920
    %991 = vst [vmem:[#allocation2 + $0x18] sm:$0xff] %v925
    %992 = vst [vmem:[#allocation2 + $0x20] sm:$0xff] %v930
    %993 = vst [vmem:[#allocation2 + $0x28] sm:$0xff] %v935
    %994 = vst [vmem:[#allocation2 + $0x30] sm:$0xff] %v940
    %995 = vst [vmem:[#allocation2 + $0x38] sm:$0xff] %v945
    %996 = vst [vmem:[#allocation2 + $0x40] sm:$0xff] %v950
    %997 = vst [vmem:[#allocation2 + $0x48] sm:$0xff] %v955
    %998 = vst [vmem:[#allocation2 + $0x50] sm:$0xff] %v960
    %999 = vst [vmem:[#allocation2 + $0x58] sm:$0xff] %v965
    %1000 = vst [vmem:[#allocation2 + $0x60] sm:$0xff] %v970
    %1001 = vst [vmem:[#allocation2 + $0x68] sm:$0xff] %v975
    %1002 = vst [vmem:[#allocation2 + $0x70] sm:$0xff] %v980
    %1003 = vst [vmem:[#allocation2 + $0x78] sm:$0xff] %v985
    // Predicated region
    $region30: #{tpu_custom_call.1} parent=1 // pred_check
      _
    $region31: #{tpu_custom_call.1} parent=1 // pred_check_branch
      %1005 = sbr.rel (0) target = $region33
    $region32: #{tpu_custom_call.1} parent=1 // pred_region
      %s1007 = ssub.s32 2048, 2048
      %1008 = vsyncadd [#allocation3], %s1007
      %s1009 = sshll.u32 [#allocation2], 4
      %s1010 = int_to_ptr.vmem [resolvable:$true] %s1009
      %1015 = dma.vmem_to_hbm [thread:$0]  %s1010, 2048, %s7, [#allocation3], 128, 128, 8
    $region33: #{tpu_custom_call.1} parent=1 // pred_fallthru
      _
    // Predicated region
    $region34: #{tpu_custom_call.1} parent=1 // pred_check
      _
    $region35: #{tpu_custom_call.1} parent=1 // pred_check_branch
      %1017 = sbr.rel (0) target = $region37
    $region36: #{tpu_custom_call.1} parent=1 // pred_region
      %1018 = dma.done [#allocation3], 2048
    $region37: #{tpu_custom_call.1} parent=1 // pred_fallthru
      _
    %1019 = vsyncpa [#allocation3], 1

</llo_original>
